<compile_context>
chip_gen: v7x
topology: tpu7x:2x2x1
jax: 0.10.0
libtpu: 0.0.40
codegen_flags: <defaults>
</compile_context>

<pallas_src>
import jax
import jax.numpy as jnp
from jax import lax
from jax.experimental import pallas as pl
from jax.experimental.pallas import tpu as pltpu


# (B, K) x (N, K) -> (B, N): contract the K axis of the PyTorch-layout weight,
# so no wrapper-side transpose (and no extra HBM rewrite of the weights) is needed.
_NT_DIMS = (((1,), (1,)), ((), ()))


def _gate_activations(gates, H):
    """All four gate nonlinearities in one full-width tanh pass.

    gates: (B, 4H) f32 pre-activations in PyTorch gate order (i, f, g, o).
    sigmoid(x) = 0.5 * (1 + tanh(0.5 * x)) for i/f/o; plain tanh for g.
    Doing the tanh on the full 4H-lane slab keeps the EUP lane-dense and uses
    one transcendental per sigmoid instead of exp + reciprocal.
    """
    col = lax.broadcasted_iota(jnp.int32, (1, 4 * H), 1)
    is_g = jnp.logical_and(col >= 2 * H, col < 3 * H)
    scale = jnp.where(is_g, 1.0, 0.5).astype(gates.dtype)   # pre- and post-scale
    offset = jnp.where(is_g, 0.0, 0.5).astype(gates.dtype)  # post-offset
    act = jnp.tanh(gates * scale) * scale + offset
    return (act[:, 0 * H:1 * H], act[:, 1 * H:2 * H],
            act[:, 2 * H:3 * H], act[:, 3 * H:4 * H])


def lstm_cell_zero_state_kernel(x_ref, wih_ref, bih_ref, bhh_ref, h_out_ref):
    """Specialized for h0 = c0 = 0: W_hh matmul and f*c term are provably zero."""
    H = h_out_ref.shape[-1]
    gates = lax.dot_general(x_ref[...], wih_ref[...], _NT_DIMS,
                            preferred_element_type=jnp.float32)
    gates = gates + bih_ref[...] + bhh_ref[...]            # (1, 4H) broadcast
    i, _f, g, o = _gate_activations(gates, H)
    c_new = i * g                                          # f * c0 == 0
    h_out_ref[...] = (o * jnp.tanh(c_new)).astype(h_out_ref.dtype)


def lstm_cell_kernel(x_ref, h_ref, c_ref, wih_ref, whh_ref, bih_ref, bhh_ref,
                     h_out_ref, c_out_ref):
    """General LSTM cell with real (h, c) state, returning (h_new, c_new)."""
    H = h_out_ref.shape[-1]
    gates = lax.dot_general(x_ref[...], wih_ref[...], _NT_DIMS,
                            preferred_element_type=jnp.float32)
    gates = gates + lax.dot_general(h_ref[...], whh_ref[...], _NT_DIMS,
                                    preferred_element_type=jnp.float32)
    gates = gates + bih_ref[...] + bhh_ref[...]
    i, f, g, o = _gate_activations(gates, H)
    c_new = f * c_ref[...].astype(jnp.float32) + i * g
    h_out_ref[...] = (o * jnp.tanh(c_new)).astype(h_out_ref.dtype)
    c_out_ref[...] = c_new.astype(c_out_ref.dtype)


def custom_lstm_cell(x, w_ih, w_hh, b_ih, b_hh, *, compute_dtype=jnp.float32):
    """Pallas equivalent of CustomLSTMCell.forward(x) -> h_1 (zero initial state).

    x: (B, input_size); w_ih: (4H, input_size); w_hh: (4H, H); b_*: (4H,)
    (PyTorch layouts, gate order i, f, g, o.)  With the zero initial state
    w_hh contributes nothing, so it is neither transposed nor DMA'd.
    """
    del w_hh  # dead with zero initial hidden state (h0 @ w_hh^T == 0)
    B = x.shape[0]
    H4 = w_ih.shape[0]
    H = H4 // 4
    bih = b_ih.astype(jnp.float32).reshape(1, H4)
    bhh = b_hh.astype(jnp.float32).reshape(1, H4)
    return pl.pallas_call(
        lstm_cell_zero_state_kernel,
        out_shape=jax.ShapeDtypeStruct((B, H), jnp.float32),
        in_specs=[pl.BlockSpec(memory_space=pltpu.VMEM)] * 4,
        out_specs=pl.BlockSpec(memory_space=pltpu.VMEM),
    )(x.astype(compute_dtype), w_ih.astype(compute_dtype), bih, bhh)


def custom_lstm_cell_with_state(x, h, c, w_ih, w_hh, b_ih, b_hh, *,
                                compute_dtype=jnp.float32):
    """General single-step LSTM cell: returns (h_new, c_new) for recurrent use."""
    B = x.shape[0]
    H4 = w_ih.shape[0]
    H = H4 // 4
    bih = b_ih.astype(jnp.float32).reshape(1, H4)
    bhh = b_hh.astype(jnp.float32).reshape(1, H4)
    return pl.pallas_call(
        lstm_cell_kernel,
        out_shape=(jax.ShapeDtypeStruct((B, H), jnp.float32),
                   jax.ShapeDtypeStruct((B, H), jnp.float32)),
        in_specs=[pl.BlockSpec(memory_space=pltpu.VMEM)] * 7,
        out_specs=(pl.BlockSpec(memory_space=pltpu.VMEM),
                   pl.BlockSpec(memory_space=pltpu.VMEM)),
    )(x.astype(compute_dtype), h.astype(compute_dtype), c.astype(jnp.float32),
      w_ih.astype(compute_dtype), w_hh.astype(compute_dtype), bih, bhh)


def lstm_cell_ref(x, h, c, w_ih, w_hh, b_ih, b_hh):
    """Pure-JAX reference matching torch.nn.LSTMCell."""
    H = w_hh.shape[1]
    gates = x @ w_ih.T + h @ w_hh.T + b_ih + b_hh
    i = jax.nn.sigmoid(gates[:, 0 * H:1 * H])
    f = jax.nn.sigmoid(gates[:, 1 * H:2 * H])
    g = jnp.tanh(gates[:, 2 * H:3 * H])
    o = jax.nn.sigmoid(gates[:, 3 * H:4 * H])
    c_new = f * c + i * g
    return o * jnp.tanh(c_new), c_new


if __name__ == "__main__":
    import numpy as np

    batch, input_size, hidden_size = 2, 16, 32

    key = jax.random.PRNGKey(0)
    kx, kh, kc, k1, k2, k3, k4 = jax.random.split(key, 7)

    # PyTorch LSTMCell default init: U(-1/sqrt(H), 1/sqrt(H)).
    bound = 1.0 / np.sqrt(hidden_size)
    x = jax.random.normal(kx, (batch, input_size), jnp.float32)
    w_ih = jax.random.uniform(k1, (4 * hidden_size, input_size), jnp.float32, -bound, bound)
    w_hh = jax.random.uniform(k2, (4 * hidden_size, hidden_size), jnp.float32, -bound, bound)
    b_ih = jax.random.uniform(k3, (4 * hidden_size,), jnp.float32, -bound, bound)
    b_hh = jax.random.uniform(k4, (4 * hidden_size,), jnp.float32, -bound, bound)

    zeros = jnp.zeros((batch, hidden_size), jnp.float32)
    h_ref, _ = lstm_cell_ref(x, zeros, zeros, w_ih, w_hh, b_ih, b_hh)

    # 1) Module semantics: zero initial state, fp32 (matches PyTorch exactly).
    h_out = jax.block_until_ready(custom_lstm_cell(x, w_ih, w_hh, b_ih, b_hh))
    np.testing.assert_allclose(np.asarray(h_out), np.asarray(h_ref),
                               rtol=1e-5, atol=1e-5)

    # 2) bf16 matmul-operand path (halves weight DMA bytes, bf16-native MXU);
    #    accumulation / activations stay fp32 inside the kernel.
    h_bf16 = jax.block_until_ready(
        custom_lstm_cell(x, w_ih, w_hh, b_ih, b_hh, compute_dtype=jnp.bfloat16))
    np.testing.assert_allclose(np.asarray(h_bf16), np.asarray(h_ref),
                               rtol=3e-2, atol=3e-2)

    # 3) General stateful cell (nonzero h, c) for recurrent use.
    h0 = jax.random.normal(kh, (batch, hidden_size), jnp.float32)
    c0 = jax.random.normal(kc, (batch, hidden_size), jnp.float32)
    h1, c1 = custom_lstm_cell_with_state(x, h0, c0, w_ih, w_hh, b_ih, b_hh)
    h1, c1 = jax.block_until_ready((h1, c1))
    h1_ref, c1_ref = lstm_cell_ref(x, h0, c0, w_ih, w_hh, b_ih, b_hh)
    np.testing.assert_allclose(np.asarray(h1), np.asarray(h1_ref), rtol=1e-5, atol=1e-5)
    np.testing.assert_allclose(np.asarray(c1), np.asarray(c1_ref), rtol=1e-5, atol=1e-5)

    print("KERNEL_OK")
</pallas_src>

<mosaic_0001>
module attributes {stable_mosaic.version = 11 : i64} {
  func.func @lstm_cell_zero_state_kernel(%arg0: memref<2x16xf32, #tpu.memory_space<vmem>>, %arg1: memref<128x16xf32, #tpu.memory_space<vmem>>, %arg2: memref<1x128xf32, #tpu.memory_space<vmem>>, %arg3: memref<1x128xf32, #tpu.memory_space<vmem>>, %arg4: memref<2x32xf32, #tpu.memory_space<vmem>>) attributes {dimension_semantics = [], scalar_prefetch = 0 : i64, scratch_operands = 0 : i64, tpu.core_type = #tpu.core_type<tc>} {
    %c0 = arith.constant 0 : index
    %c0_0 = arith.constant 0 : index
    %0 = vector.load %arg0[%c0, %c0_0] : memref<2x16xf32, #tpu.memory_space<vmem>>, vector<2x16xf32>
    %c0_1 = arith.constant 0 : index
    %c0_2 = arith.constant 0 : index
    %1 = vector.load %arg1[%c0_1, %c0_2] : memref<128x16xf32, #tpu.memory_space<vmem>>, vector<128x16xf32>
    %cst = arith.constant dense<0.000000e+00> : vector<2x128xf32>
    %2 = tpu.matmul %0, %1, %cst {dimension_numbers = #tpu.dot_dimension_numbers<[1], [1], [0], [0], [0, 0, 1, 0], [], []>} : vector<2x16xf32>, vector<128x16xf32>, vector<2x128xf32> -> vector<2x128xf32>
    %c0_3 = arith.constant 0 : index
    %c0_4 = arith.constant 0 : index
    %3 = vector.load %arg2[%c0_3, %c0_4] : memref<1x128xf32, #tpu.memory_space<vmem>>, vector<1x128xf32>
    %4 = vector.broadcast %3 : vector<1x128xf32> to vector<2x128xf32>
    %5 = arith.addf %2, %4 : vector<2x128xf32>
    %c0_5 = arith.constant 0 : index
    %c0_6 = arith.constant 0 : index
    %6 = vector.load %arg3[%c0_5, %c0_6] : memref<1x128xf32, #tpu.memory_space<vmem>>, vector<1x128xf32>
    %7 = vector.broadcast %6 : vector<1x128xf32> to vector<2x128xf32>
    %8 = arith.addf %5, %7 : vector<2x128xf32>
    %9 = tpu.iota {dimensions = array<i32: 1>} : vector<1x128xi32>
    %c64_i32 = arith.constant 64 : i32
    %10 = vector.broadcast %c64_i32 : i32 to vector<1x128xi32>
    %11 = arith.cmpi sge, %9, %10 : vector<1x128xi32>
    %c96_i32 = arith.constant 96 : i32
    %12 = vector.broadcast %c96_i32 : i32 to vector<1x128xi32>
    %13 = arith.cmpi slt, %9, %12 : vector<1x128xi32>
    %14 = arith.andi %11, %13 : vector<1x128xi1>
    %cst_7 = arith.constant 1.000000e+00 : f32
    %cst_8 = arith.constant 5.000000e-01 : f32
    %15 = vector.broadcast %cst_7 : f32 to vector<1x128xf32>
    %16 = vector.broadcast %cst_8 : f32 to vector<1x128xf32>
    %17 = arith.select %14, %15, %16 : vector<1x128xi1>, vector<1x128xf32>
    %cst_9 = arith.constant 0.000000e+00 : f32
    %cst_10 = arith.constant 5.000000e-01 : f32
    %18 = vector.broadcast %cst_9 : f32 to vector<1x128xf32>
    %19 = vector.broadcast %cst_10 : f32 to vector<1x128xf32>
    %20 = arith.select %14, %18, %19 : vector<1x128xi1>, vector<1x128xf32>
    %21 = vector.broadcast %17 : vector<1x128xf32> to vector<2x128xf32>
    %22 = arith.mulf %8, %21 : vector<2x128xf32>
    %23 = math.tanh %22 : vector<2x128xf32>
    %24 = vector.broadcast %17 : vector<1x128xf32> to vector<2x128xf32>
    %25 = arith.mulf %23, %24 : vector<2x128xf32>
    %26 = vector.broadcast %20 : vector<1x128xf32> to vector<2x128xf32>
    %27 = arith.addf %25, %26 : vector<2x128xf32>
    %28 = vector.extract_strided_slice %27 {offsets = [0, 0], sizes = [2, 32], strides = [1, 1]} : vector<2x128xf32> to vector<2x32xf32>
    %29 = vector.extract_strided_slice %27 {offsets = [0, 64], sizes = [2, 32], strides = [1, 1]} : vector<2x128xf32> to vector<2x32xf32>
    %30 = vector.extract_strided_slice %27 {offsets = [0, 96], sizes = [2, 32], strides = [1, 1]} : vector<2x128xf32> to vector<2x32xf32>
    %31 = arith.mulf %28, %29 : vector<2x32xf32>
    %32 = math.tanh %31 : vector<2x32xf32>
    %33 = arith.mulf %30, %32 : vector<2x32xf32>
    %c0_11 = arith.constant 0 : index
    %c0_12 = arith.constant 0 : index
    %34 = vector.load %arg4[%c0_11, %c0_12] : memref<2x32xf32, #tpu.memory_space<vmem>>, vector<2x32xf32>
    tpu.vector_store %arg4[%c0_11, %c0_12], %33 {strides = array<i32>} : memref<2x32xf32, #tpu.memory_space<vmem>>, vector<2x32xf32>,
    return
  }
}

</mosaic_0001>

<llo_original>
// kernel: tpu_custom_call.1
$region0: #{tpu_custom_call.1}
  #allocation0 [shape = 'u32[]', space=smem, size = 0x4, offset = 0x4, fixed_abs, tag = 'smem constant byte address 0x4 - core index']
  #allocation1 [shape = 'u32[144,128]{1,0:T(1,128)}', space=vmem, size = 0x12000, scoped, tag = 'internal scratch']
  %s0 = inlined_call_operand.vmem [shape: f32[2,16], index: 0, kind: input, shape index: {}]
  %s1 = inlined_call_operand.vmem [shape: f32[128,16], index: 1, kind: input, shape index: {}]
  %s2 = inlined_call_operand.vmem [shape: f32[1,128], index: 2, kind: input, shape index: {}]
  %s3 = inlined_call_operand.vmem [shape: f32[1,128], index: 3, kind: input, shape index: {}]
  %s4 = inlined_call_operand.hbm [shape: f32[2,32], index: 4, kind: output, shape index: {}]
  %s5 = sld [smem:[#allocation0]]
  $region26: #{tpu_custom_call.1} parent=0
    _
  %s7 = ssub.s32 1, %s5
  %s8 = scalar_select 0, %s7, %s5
  $region1: #{tpu_custom_call.1} parent=0
    #allocation2 [shape = 'u8[1024]{0}', space=vmem, size = 0x400, scoped, tag = 'output window, operand 0, single buffered']
    #allocation3 [shape = 's32[1]{0}', space=sflag, size = 0x4, scoped, tag = 'scoped memory for tpu_custom_call.1']
    %9 = vsyncpa [#allocation3], 0
    // Predicated region
    $region2: #{tpu_custom_call.1} parent=1 // pred_check
      _
    $region3: #{tpu_custom_call.1} parent=1 // pred_check_branch
      %11 = sbr.rel (0) target = $region5
    $region4: #{tpu_custom_call.1} parent=1 // pred_region
      _
    $region5: #{tpu_custom_call.1} parent=1 // pred_fallthru
      _
    // Predicated region
    $region6: #{tpu_custom_call.1} parent=1 // pred_check
      _
    $region7: #{tpu_custom_call.1} parent=1 // pred_check_branch
      %13 = sbr.rel (0) target = $region9
    $region8: #{tpu_custom_call.1} parent=1 // pred_region
      _
    $region9: #{tpu_custom_call.1} parent=1 // pred_fallthru
      _
    // Predicated region
    $region10: #{tpu_custom_call.1} parent=1 // pred_check
      _
    $region11: #{tpu_custom_call.1} parent=1 // pred_check_branch
      %15 = sbr.rel (0) target = $region13
    $region12: #{tpu_custom_call.1} parent=1 // pred_region
      _
    $region13: #{tpu_custom_call.1} parent=1 // pred_fallthru
      _
    // Predicated region
    $region14: #{tpu_custom_call.1} parent=1 // pred_check
      _
    $region15: #{tpu_custom_call.1} parent=1 // pred_check_branch
      %17 = sbr.rel (0) target = $region17
    $region16: #{tpu_custom_call.1} parent=1 // pred_region
      _
    $region17: #{tpu_custom_call.1} parent=1 // pred_fallthru
      _
    %v18 = vld [vmem:[%s0] sm:$0x3]
    %v19 = vld [vmem:[%s1] sm:$0xff]
    %v20 = vld [vmem:[%s1 + $0x8] sm:$0xff]
    %v21 = vld [vmem:[%s1 + $0x10] sm:$0xff]
    %v22 = vld [vmem:[%s1 + $0x18] sm:$0xff]
    %v23 = vld [vmem:[%s1 + $0x20] sm:$0xff]
    %v24 = vld [vmem:[%s1 + $0x28] sm:$0xff]
    %v25 = vld [vmem:[%s1 + $0x30] sm:$0xff]
    %v26 = vld [vmem:[%s1 + $0x38] sm:$0xff]
    %v27 = vld [vmem:[%s1 + $0x40] sm:$0xff]
    %v28 = vld [vmem:[%s1 + $0x48] sm:$0xff]
    %v29 = vld [vmem:[%s1 + $0x50] sm:$0xff]
    %v30 = vld [vmem:[%s1 + $0x58] sm:$0xff]
    %v31 = vld [vmem:[%s1 + $0x60] sm:$0xff]
    %v32 = vld [vmem:[%s1 + $0x68] sm:$0xff]
    %v33 = vld [vmem:[%s1 + $0x70] sm:$0xff]
    %v34 = vld [vmem:[%s1 + $0x78] sm:$0xff]
    %v35 = vld [vmem:[%s2] sm:$0x1]
    %v37 = vlaneseq
    %v38 = vshrl.u32 %v37, 7
    %v39 = vsub.s32 0, %v38
    %v40 = vrot.slane %v35, %v39
    %vm42 = vcmask 130048
    %v44 = vsel %vm42, %v18, 0
    %v47 = vsel %vm42, %v19, 0
    %v50 = vsel %vm42, %v20, 0
    %v53 = vsel %vm42, %v21, 0
    %v56 = vsel %vm42, %v22, 0
    %v59 = vsel %vm42, %v23, 0
    %v62 = vsel %vm42, %v24, 0
    %v65 = vsel %vm42, %v25, 0
    %v68 = vsel %vm42, %v26, 0
    %v71 = vsel %vm42, %v27, 0
    %v74 = vsel %vm42, %v28, 0
    %v77 = vsel %vm42, %v29, 0
    %v80 = vsel %vm42, %v30, 0
    %v83 = vsel %vm42, %v31, 0
    %v86 = vsel %vm42, %v32, 0
    %v89 = vsel %vm42, %v33, 0
    %v92 = vsel %vm42, %v34, 0
    %94 = vmatprep.subr.mxu0 0.0
    %95 = vmatpush1.xpose.msra.mxu0 %v47
    %96 = vmatprep.subr.mxu0 0.0
    %97 = vmatpush1.xpose.msra.mxu0 %v50
    %98 = vmatprep.subr.mxu0 0.0
    %99 = vmatpush1.xpose.msra.mxu0 %v53
    %100 = vmatprep.subr.mxu0 0.0
    %101 = vmatpush1.xpose.msra.mxu0 %v56
    %102 = vmatprep.subr.mxu0 0.0
    %103 = vmatpush1.xpose.msra.mxu0 %v59
    %104 = vmatprep.subr.mxu0 0.0
    %105 = vmatpush1.xpose.msra.mxu0 %v62
    %106 = vmatprep.subr.mxu0 0.0
    %107 = vmatpush1.xpose.msra.mxu0 %v65
    %108 = vmatprep.subr.mxu0 0.0
    %109 = vmatpush1.xpose.msra.mxu0 %v68
    %110 = vmatprep.subr.mxu0 0.0
    %111 = vmatpush1.xpose.msra.mxu0 %v71
    %112 = vmatprep.subr.mxu0 0.0
    %113 = vmatpush1.xpose.msra.mxu0 %v74
    %114 = vmatprep.subr.mxu0 0.0
    %115 = vmatpush1.xpose.msra.mxu0 %v77
    %116 = vmatprep.subr.mxu0 0.0
    %117 = vmatpush1.xpose.msra.mxu0 %v80
    %118 = vmatprep.subr.mxu0 0.0
    %119 = vmatpush1.xpose.msra.mxu0 %v83
    %120 = vmatprep.subr.mxu0 0.0
    %121 = vmatpush1.xpose.msra.mxu0 %v86
    %122 = vmatprep.subr.mxu0 0.0
    %123 = vmatpush1.xpose.msra.mxu0 %v89
    %124 = vmatprep.subr.mxu0 0.0
    %125 = vmatpush1.xpose.msra.mxu0 %v92
    %126 = vmatprep.subr.mxu0 0.0
    %127 = vmatpush1.xpose.msra.mxu0 0.0
    %128 = vmatprep.subr.mxu0 0.0
    %129 = vmatpush1.xpose.msra.mxu0 0.0
    %130 = vmatprep.subr.mxu0 0.0
    %131 = vmatpush1.xpose.msra.mxu0 0.0
    %132 = vmatprep.subr.mxu0 0.0
    %133 = vmatpush1.xpose.msra.mxu0 0.0
    %134 = vmatprep.subr.mxu0 0.0
    %135 = vmatpush1.xpose.msra.mxu0 0.0
    %136 = vmatprep.subr.mxu0 0.0
    %137 = vmatpush1.xpose.msra.mxu0 0.0
    %138 = vmatprep.subr.mxu0 0.0
    %139 = vmatpush1.xpose.msra.mxu0 0.0
    %140 = vmatprep.subr.mxu0 0.0
    %141 = vmatpush1.xpose.msra.mxu0 0.0
    %142 = vmatprep.subr.mxu0 0.0
    %143 = vmatpush1.xpose.msra.mxu0 0.0
    %144 = vmatprep.subr.mxu0 0.0
    %145 = vmatpush1.xpose.msra.mxu0 0.0
    %146 = vmatprep.subr.mxu0 0.0
    %147 = vmatpush1.xpose.msra.mxu0 0.0
    %148 = vmatprep.subr.mxu0 0.0
    %149 = vmatpush1.xpose.msra.mxu0 0.0
    %150 = vmatprep.subr.mxu0 0.0
    %151 = vmatpush1.xpose.msra.mxu0 0.0
    %152 = vmatprep.subr.mxu0 0.0
    %153 = vmatpush1.xpose.msra.mxu0 0.0
    %154 = vmatprep.subr.mxu0 0.0
    %155 = vmatpush1.xpose.msra.mxu0 0.0
    %156 = vmatprep.subr.mxu0 0.0
    %157 = vmatpush1.xpose.msra.mxu0 0.0
    %158 = vmatprep.mubr.f32.mxu0 0.0
    %159 = vmatmul.mubr.f32.gmra.mrb[0].mxu0 %v44
    %v160 = vpop.f32.mrb[0].mxu0
    %v161 = vadd.f32 %v40, %v160
    %v162 = vpop.f32.mrb[0].mxu0
    %163 = vdwg.mxu0
    %v164 = vld [vmem:[%s3] sm:$0x1]
    %v166 = vlaneseq
    %v167 = vshrl.u32 %v166, 7
    %v168 = vsub.s32 0, %v167
    %v169 = vrot.slane %v164, %v168
    %v171 = vadd.f32 %v161, %v169
    %v172 = vlaneseq
    %v173 = vand.u32 %v172, 127
    %vm174 = vcmp.ge.s32.totalorder %v173, 64
    %vm175 = vcmp.lt.s32.totalorder %v173, 96
    %vm176 = vmand %vm174, %vm175
    %v177 = vsel %vm176, 1.0, 0.5
    %v178 = vsel %vm176, 0.0, 0.5
    %v179 = vmul.f32 %v171, %v177
    %v180 = vtanh.pop %v179
    %v181 = vmul.f32 %v180, %v177
    %v182 = vadd.f32 %v181, %v178
    %184 = vrot.lane.b32.xlu0 %v182, 64
    %v185 = vpop.permute.xlu0 %184
    %v187 = vmul.f32 %v182, %v185
    %v188 = vtanh.pop %v187
    %190 = vrot.lane.b32.xlu0 %v188, 96
    %v191 = vpop.permute.xlu0 %190
    %v193 = vmul.f32 %v182, %v191
    %195 = vrot.lane.b32.xlu0 %v193, 32
    %v196 = vpop.permute.xlu0 %195
    %vm198 = vcmask 254976
    %199 = vst.msk [vmem:[#allocation2] sm:$0x3] %vm198, %v196
    // Predicated region
    $region18: #{tpu_custom_call.1} parent=1 // pred_check
      _
    $region19: #{tpu_custom_call.1} parent=1 // pred_check_branch
      %201 = sbr.rel (0) target = $region21
    $region20: #{tpu_custom_call.1} parent=1 // pred_region
      %s203 = ssub.s32 32, 32
      %204 = vsyncadd [#allocation3], %s203
      %s206 = sshll.u32 [#allocation2], 4
      %s207 = int_to_ptr.vmem [resolvable:$true] %s206
      %209 = dma.vmem_to_hbm [thread:$0]  %s207, 32, %s4, [#allocation3]
    $region21: #{tpu_custom_call.1} parent=1 // pred_fallthru
      _
    // Predicated region
    $region22: #{tpu_custom_call.1} parent=1 // pred_check
      _
    $region23: #{tpu_custom_call.1} parent=1 // pred_check_branch
      %211 = sbr.rel (0) target = $region25
    $region24: #{tpu_custom_call.1} parent=1 // pred_region
      %212 = dma.done [#allocation3], 32
    $region25: #{tpu_custom_call.1} parent=1 // pred_fallthru
      _
    %213 = vsyncpa [#allocation3], 1

</llo_original>
